<compile_context>
chip_gen: v7x
topology: tpu7x:2x2x1
jax: 0.10.0
libtpu: 0.0.40
codegen_flags: <defaults>
</compile_context>

<pallas_src>
import functools

import jax
import jax.numpy as jnp
from jax.experimental import pallas as pl
from jax.experimental.pallas import tpu as pltpu


# ----------------------------------------------------------------------------
# helpers
# ----------------------------------------------------------------------------
def _round_up(n, m):
    return ((n + m - 1) // m) * m


def _pad2(a, rows, cols):
    return jnp.pad(a, ((0, rows - a.shape[0]), (0, cols - a.shape[1])))


def _recip(x):
    # EUP approximate reciprocal + ONE Newton step (review: 2nd step is not
    # needed to recover ~f32 for a softmax denominator).
    r = pl.reciprocal(x, approx=True)
    return r * (2.0 - x * r)


# Mask value for padded latent lanes.  Activations stay f32 everywhere the
# mask is applied, so -1e30 is safe (would overflow only if moved to bf16).
NEG_BIG = -1e30


# ----------------------------------------------------------------------------
# Fused VAE forward kernel (one pallas_call for the whole network)
# ----------------------------------------------------------------------------
def _fused_vae_kernel(*refs, n_q, n_p, n_dec, latent, inv_temp):
    rec_ref, aq_ref, ap_ref, z_ref, hp_ref = refs[-5:]
    it = iter(refs[:-5])

    xc = next(it)[...]        # (bt, xc_p)  f32  -- x||c, concatenated in wrapper
    c = next(it)[...]         # (bt, nl_p)  f32  -- p-branch input
    g = next(it)[...]         # (bt, lat_p) f32  -- Gumbel noise

    def dense(a, w_ref, b_ref):
        # One bf16 MXU pass (identical to a default-precision f32 matmul),
        # f32 accumulation, f32 bias add.
        return jnp.dot(a.astype(jnp.bfloat16), w_ref[...],
                       preferred_element_type=jnp.float32) + b_ref[...]

    # ---- encoder, q branch: cat(x, c) already folded into one weight ----
    h = xc
    for _ in range(n_q):
        h = jnp.maximum(dense(h, next(it), next(it)), 0.0)
    logits_q = dense(h, next(it), next(it))          # (bt, lat_p)

    # valid-lane mask over the zero-padded latent dimension
    lane = jax.lax.broadcasted_iota(jnp.int32, logits_q.shape, 1)
    valid = lane < latent

    def masked_softmax(logits, with_log):
        lg = jnp.where(valid, logits, NEG_BIG)
        m = jnp.max(lg, axis=-1, keepdims=True)
        e = jnp.exp(lg - m)
        s = jnp.sum(e, axis=-1, keepdims=True)
        sm = e * _recip(s)
        if with_log:            # only the q branch needs the log-softmax
            return sm, (lg - m) - jnp.log(s)
        return sm

    alpha_q, log_alpha_q = masked_softmax(logits_q, True)

    # ---- sample_q: relaxed categorical (Gumbel-softmax, temperature tau) ----
    y = jnp.where(valid, (log_alpha_q + g) * inv_temp, NEG_BIG)
    ey = jnp.exp(y - jnp.max(y, axis=-1, keepdims=True))
    z = ey * _recip(jnp.sum(ey, axis=-1, keepdims=True))

    # ---- encoder, p branch (softmax-only; no dead log-softmax) ----
    hp = c
    for _ in range(n_p):
        hp = jnp.maximum(dense(hp, next(it), next(it)), 0.0)
    alpha_p = masked_softmax(dense(hp, next(it), next(it)), False)

    # ---- decoder ----
    d = z
    for i in range(n_dec):
        d = dense(d, next(it), next(it))
        if i + 1 < n_dec:
            d = jnp.maximum(d, 0.0)
        else:
            d = 0.5 * (jnp.tanh(0.5 * d) + 1.0)      # sigmoid via the EUP tanh

    rec_ref[...] = d
    aq_ref[...] = alpha_q
    ap_ref[...] = alpha_p
    z_ref[...] = z
    hp_ref[...] = hp


# ----------------------------------------------------------------------------
# One-time parameter packing
# ----------------------------------------------------------------------------
def pack_vae_params(params, d_x, num_labels):
    """Transpose weights to [in, out], pad out-dims to 128 lanes (lane-dense
    stores, MXU-friendly) and the data-facing contraction dims only to 16
    rows, and cast the weights to bf16 (halves weight HBM traffic / resident
    VMEM; numerics unchanged since the matmul runs a bf16 MXU pass anyway).
    Biases stay f32 (negligible bytes, exact bias add)."""
    LANE = 128
    ROW = 16      # covers both the f32 (8) and bf16 (16) sublane tiles
    latent = params["latent_q"]["b"].shape[0]
    packed = []

    def add(w_out_in, b, rows_p, cols_p):
        packed.append(_pad2(w_out_in.T, rows_p, cols_p).astype(jnp.bfloat16))
        packed.append(_pad2(b.reshape(1, -1), 1, cols_p))     # f32

    xc_dim = d_x + num_labels
    xc_p = _round_up(xc_dim, ROW)
    nl_p = _round_up(num_labels, ROW)
    lat_p = _round_up(latent, LANE)

    # q branch (torch weight rows are already ordered [x ; c] like the cat)
    prev_p = xc_p
    for lyr in params["mlp_q"]:
        out_p = _round_up(lyr["w"].shape[0], LANE)
        add(lyr["w"], lyr["b"], prev_p, out_p)
        prev_p = out_p
    add(params["latent_q"]["w"], params["latent_q"]["b"], prev_p, lat_p)

    # p branch
    prev_p = nl_p
    hp_dim, hp_dim_p = num_labels, nl_p
    for lyr in params["mlp_p"]:
        out = lyr["w"].shape[0]
        out_p = _round_up(out, LANE)
        add(lyr["w"], lyr["b"], prev_p, out_p)
        hp_dim, hp_dim_p = out, out_p
        prev_p = out_p
    add(params["latent_p"]["w"], params["latent_p"]["b"], prev_p, lat_p)

    # decoder
    prev_p = lat_p
    rec_dim, rec_dim_p = latent, lat_p
    for lyr in params["decoder"]:
        out = lyr["w"].shape[0]
        out_p = _round_up(out, LANE)
        add(lyr["w"], lyr["b"], prev_p, out_p)
        rec_dim, rec_dim_p = out, out_p
        prev_p = out_p

    meta = dict(d_x=d_x, num_labels=num_labels, latent=latent,
                xc_dim=xc_dim, xc_p=xc_p, nl_p=nl_p, lat_p=lat_p,
                hp_dim=hp_dim, hp_dim_p=hp_dim_p,
                rec_dim=rec_dim, rec_dim_p=rec_dim_p,
                n_q=len(params["mlp_q"]), n_p=len(params["mlp_p"]),
                n_dec=len(params["decoder"]))
    return packed, meta


# ----------------------------------------------------------------------------
# Generation-aware batch tile selection
# ----------------------------------------------------------------------------
def _select_batch_tile(B):
    """Return (bt, b_pad): sublane-aligned batch tile + padded batch.

    v7x (2 TCs/chip): tiles <= 128 rows and an EVEN number of grid steps
    (when there is enough work) so the "parallel" batch axis splits across
    both TensorCores.  v5e/v6e (1 TC): a single big tile (up to 512 rows)
    amortizes the ~0.35us/step pipeline overhead.  Padding waste is kept
    minimal (e.g. B=136 -> bt=136, zero garbage rows)."""
    b8 = _round_up(max(B, 1), 8)
    try:
        kind = jax.devices()[0].device_kind.lower()
    except Exception:
        kind = ""
    dual_tc = "v7" in kind

    if dual_tc:
        if b8 <= 16:
            return b8, b8                              # too little to split
        n_steps = max(2, 2 * ((b8 + 255) // 256))      # even, <=128-row tiles
        bt = _round_up((b8 + n_steps - 1) // n_steps, 8)
        return bt, bt * n_steps

    if b8 <= 512:
        return b8, b8                                  # one step, zero waste
    best = None
    for bt in range(256, 513, 8):                      # minimize padded rows
        b_pad = _round_up(b8, bt)
        key = (b_pad - b8, -bt)
        if best is None or key < best[0]:
            best = (key, bt, b_pad)
    return best[1], best[2]


# ----------------------------------------------------------------------------
# Forward builder
# ----------------------------------------------------------------------------
def make_vae_forward(params, d_x, num_labels, temperature=0.67):
    """Returns a jitted forward(x, c, gumbel) -> (recon_x, alpha_q, alpha_p, z, hidden_p)."""
    packed, meta = pack_vae_params(params, d_x, num_labels)
    kernel = functools.partial(
        _fused_vae_kernel,
        n_q=meta["n_q"], n_p=meta["n_p"], n_dec=meta["n_dec"],
        latent=meta["latent"], inv_temp=1.0 / temperature)

    # weights/biases: constant block index -> DMA'd once, stay VMEM-resident
    w_specs = [pl.BlockSpec(p.shape, lambda i: (0, 0)) for p in packed]
    xc_p, nl_p, lat_p = meta["xc_p"], meta["nl_p"], meta["lat_p"]
    rec_p, hp_p = meta["rec_dim_p"], meta["hp_dim_p"]

    def forward(x, c, gumbel):
        B = x.shape[0]
        bt, b_pad = _select_batch_tile(B)

        # Fold the torch cat(x, c) into the first matmul: one concatenated
        # buffer, lane-padded only to a multiple of 16 (full-dim blocks are
        # legal) -> no 128-lane inflation of the biggest input.
        xc = jnp.concatenate([x, c], axis=-1)
        xc = jnp.pad(xc, ((0, b_pad - B), (0, xc_p - xc.shape[-1])))
        cp = jnp.pad(c, ((0, b_pad - B), (0, nl_p - num_labels)))
        gp = jnp.pad(gumbel, ((0, b_pad - B), (0, lat_p - meta["latent"])))

        data_specs = [
            pl.BlockSpec((bt, xc_p), lambda i: (i, 0)),
            pl.BlockSpec((bt, nl_p), lambda i: (i, 0)),
            pl.BlockSpec((bt, lat_p), lambda i: (i, 0)),
        ]
        out_shapes = (
            jax.ShapeDtypeStruct((b_pad, rec_p), jnp.float32),
            jax.ShapeDtypeStruct((b_pad, lat_p), jnp.float32),
            jax.ShapeDtypeStruct((b_pad, lat_p), jnp.float32),
            jax.ShapeDtypeStruct((b_pad, lat_p), jnp.float32),
            jax.ShapeDtypeStruct((b_pad, hp_p), jnp.float32),
        )
        out_specs = (
            pl.BlockSpec((bt, rec_p), lambda i: (i, 0)),
            pl.BlockSpec((bt, lat_p), lambda i: (i, 0)),
            pl.BlockSpec((bt, lat_p), lambda i: (i, 0)),
            pl.BlockSpec((bt, lat_p), lambda i: (i, 0)),
            pl.BlockSpec((bt, hp_p), lambda i: (i, 0)),
        )
        rec, aq, ap, z, hp = pl.pallas_call(
            kernel,
            out_shape=out_shapes,
            grid=(b_pad // bt,),
            in_specs=data_specs + w_specs,
            out_specs=out_specs,
            compiler_params=pltpu.CompilerParams(
                dimension_semantics=("parallel",)),   # batch axis -> megacore
        )(xc, cp, gp, *packed)
        # NOTE: callers that can consume padded outputs may skip these slices.
        return (rec[:B, :meta["rec_dim"]],
                aq[:B, :meta["latent"]],
                ap[:B, :meta["latent"]],
                z[:B, :meta["latent"]],
                hp[:B, :meta["hp_dim"]])

    return jax.jit(forward)


# ----------------------------------------------------------------------------
# Parameter construction (PyTorch nn.Linear-style init, deterministic)
# ----------------------------------------------------------------------------
def init_linear(key, in_size, out_size):
    kw, kb = jax.random.split(key)
    bound = 1.0 / jnp.sqrt(in_size)
    w = jax.random.uniform(kw, (out_size, in_size), jnp.float32, -bound, bound)
    b = jax.random.uniform(kb, (out_size,), jnp.float32, -bound, bound)
    return {"w": w, "b": b}   # w is [out, in] like PyTorch


def build_vae_params(key, enc_q, enc_p, latent, dec, num_labels):
    # conditional=True semantics from the module:
    enc_q = list(enc_q)
    enc_p = list(enc_p)
    enc_q[0] += num_labels
    enc_p[0] = num_labels

    keys = jax.random.split(key, 16)
    ki = iter(keys)
    params = {"mlp_q": [], "mlp_p": [], "decoder": []}
    for i_s, o_s in zip(enc_q[:-1], enc_q[1:]):
        params["mlp_q"].append(init_linear(next(ki), i_s, o_s))
    for i_s, o_s in zip(enc_p[:-1], enc_p[1:]):
        params["mlp_p"].append(init_linear(next(ki), i_s, o_s))
    params["latent_q"] = init_linear(next(ki), enc_q[-1], latent)
    params["latent_p"] = init_linear(next(ki), enc_p[-1], latent)
    for i_s, o_s in zip([latent] + dec[:-1], dec):
        params["decoder"].append(init_linear(next(ki), i_s, o_s))
    return params


# ----------------------------------------------------------------------------
# Pure-JAX reference (for a silent correctness check)
# ----------------------------------------------------------------------------
def _ref_forward(params, x, c, gumbel_noise, temperature=0.67):
    def lin(p, v):
        return v @ p["w"].T + p["b"]

    h = jnp.concatenate([x, c], axis=-1)
    for lyr in params["mlp_q"]:
        h = jax.nn.relu(lin(lyr, h))
    alpha_q = jax.nn.softmax(lin(params["latent_q"], h), axis=-1)

    hp = c
    for lyr in params["mlp_p"]:
        hp = jax.nn.relu(lin(lyr, hp))
    alpha_p = jax.nn.softmax(lin(params["latent_p"], hp), axis=-1)

    # TODO(synk): `sample_q` is defined outside the given module; implemented
    # as a standard relaxed-categorical (Gumbel-softmax) sample.
    z = jax.nn.softmax((jnp.log(alpha_q + 1e-20) + gumbel_noise) / temperature,
                       axis=-1)
    d = z
    n_dec = len(params["decoder"])
    for i, lyr in enumerate(params["decoder"]):
        d = lin(lyr, d)
        d = jax.nn.relu(d) if i + 1 < n_dec else jax.nn.sigmoid(d)
    return d, alpha_q, alpha_p, z, hp


# ----------------------------------------------------------------------------
if __name__ == "__main__":
    key = jax.random.PRNGKey(0)
    k_param, k_x, k_lbl, k_gumbel = jax.random.split(key, 4)

    # Small, MNIST-like configuration
    B = 8
    D_X = 32
    NUM_LABELS = 10
    LATENT = 16
    ENC_Q = [D_X, 64]      # layer_sizes_q (conditional adds num_labels to [0])
    ENC_P = [D_X, 64]      # layer_sizes_p ([0] replaced by num_labels)
    DEC = [64, D_X]        # decoder_layer_sizes

    params = build_vae_params(k_param, ENC_Q, ENC_P, LATENT, DEC, NUM_LABELS)

    x = jax.random.uniform(k_x, (B, D_X), jnp.float32)
    labels = jax.random.randint(k_lbl, (B,), 0, NUM_LABELS)
    c = jax.nn.one_hot(labels, NUM_LABELS, dtype=jnp.float32)

    # deterministic Gumbel noise for sample_q
    u = jax.random.uniform(k_gumbel, (B, LATENT), jnp.float32, 1e-6, 1.0 - 1e-6)
    gumbel_noise = -jnp.log(-jnp.log(u))

    # Build the fused, jitted forward once (weights packed / bf16-cast once).
    forward = make_vae_forward(params, D_X, NUM_LABELS, temperature=0.67)
    recon_x, alpha_q, alpha_p, z, features = jax.block_until_ready(
        forward(x, c, gumbel_noise))

    # Mirrors the PyTorch return tuple (nn.Linear modules -> param dicts here).
    out = (recon_x, alpha_q, alpha_p, params["latent_q"], params["latent_p"],
           z, features)

    # Silent correctness check against a pure-JAX f32 reference.  Tolerance
    # covers the single bf16 MXU pass with bf16-packed weights vs the XLA
    # reference; logic errors would produce O(0.1-1) discrepancies.
    r_recon, r_aq, r_ap, r_z, r_feat = _ref_forward(params, x, c, gumbel_noise)
    tol = dict(atol=3e-3, rtol=3e-3)
    assert jnp.allclose(recon_x, r_recon, **tol)
    assert jnp.allclose(alpha_q, r_aq, **tol)
    assert jnp.allclose(alpha_p, r_ap, **tol)
    assert jnp.allclose(z, r_z, **tol)
    assert jnp.allclose(features, r_feat, **tol)
    assert recon_x.shape == (B, D_X) and z.shape == (B, LATENT)
    assert alpha_q.shape == (B, LATENT) and alpha_p.shape == (B, LATENT)
    assert features.shape == (B, ENC_P[-1])

    print("KERNEL_OK")
</pallas_src>

<mosaic_0001>
module attributes {stable_mosaic.version = 11 : i64} {
  func.func @_fused_vae_kernel(%arg0: i32, %arg1: memref<8x48xf32, #tpu.memory_space<vmem>>, %arg2: memref<8x16xf32, #tpu.memory_space<vmem>>, %arg3: memref<8x128xf32, #tpu.memory_space<vmem>>, %arg4: memref<48x128xbf16, #tpu.memory_space<vmem>>, %arg5: memref<1x128xf32, #tpu.memory_space<vmem>>, %arg6: memref<128x128xbf16, #tpu.memory_space<vmem>>, %arg7: memref<1x128xf32, #tpu.memory_space<vmem>>, %arg8: memref<16x128xbf16, #tpu.memory_space<vmem>>, %arg9: memref<1x128xf32, #tpu.memory_space<vmem>>, %arg10: memref<128x128xbf16, #tpu.memory_space<vmem>>, %arg11: memref<1x128xf32, #tpu.memory_space<vmem>>, %arg12: memref<128x128xbf16, #tpu.memory_space<vmem>>, %arg13: memref<1x128xf32, #tpu.memory_space<vmem>>, %arg14: memref<128x128xbf16, #tpu.memory_space<vmem>>, %arg15: memref<1x128xf32, #tpu.memory_space<vmem>>, %arg16: memref<8x128xf32, #tpu.memory_space<vmem>>, %arg17: memref<8x128xf32, #tpu.memory_space<vmem>>, %arg18: memref<8x128xf32, #tpu.memory_space<vmem>>, %arg19: memref<8x128xf32, #tpu.memory_space<vmem>>, %arg20: memref<8x128xf32, #tpu.memory_space<vmem>>) attributes {dimension_semantics = [#tpu.dimension_semantics<parallel>], iteration_bounds = array<i64: 1>, scalar_prefetch = 0 : i64, scratch_operands = 0 : i64, tpu.core_type = #tpu.core_type<tc>, window_params = [{transform_indices = @transform_0, window_bounds = array<i64: 8, 48>}, {transform_indices = @transform_1, window_bounds = array<i64: 8, 16>}, {transform_indices = @transform_2, window_bounds = array<i64: 8, 128>}, {pipeline_mode = #tpu.pipeline_mode<synchronous>, transform_indices = @transform_3, window_bounds = array<i64: 48, 128>}, {pipeline_mode = #tpu.pipeline_mode<synchronous>, transform_indices = @transform_4, window_bounds = array<i64: 1, 128>}, {pipeline_mode = #tpu.pipeline_mode<synchronous>, transform_indices = @transform_5, window_bounds = array<i64: 128, 128>}, {pipeline_mode = #tpu.pipeline_mode<synchronous>, transform_indices = @transform_6, window_bounds = array<i64: 1, 128>}, {pipeline_mode = #tpu.pipeline_mode<synchronous>, transform_indices = @transform_7, window_bounds = array<i64: 16, 128>}, {pipeline_mode = #tpu.pipeline_mode<synchronous>, transform_indices = @transform_8, window_bounds = array<i64: 1, 128>}, {pipeline_mode = #tpu.pipeline_mode<synchronous>, transform_indices = @transform_9, window_bounds = array<i64: 128, 128>}, {pipeline_mode = #tpu.pipeline_mode<synchronous>, transform_indices = @transform_10, window_bounds = array<i64: 1, 128>}, {pipeline_mode = #tpu.pipeline_mode<synchronous>, transform_indices = @transform_11, window_bounds = array<i64: 128, 128>}, {pipeline_mode = #tpu.pipeline_mode<synchronous>, transform_indices = @transform_12, window_bounds = array<i64: 1, 128>}, {pipeline_mode = #tpu.pipeline_mode<synchronous>, transform_indices = @transform_13, window_bounds = array<i64: 128, 128>}, {pipeline_mode = #tpu.pipeline_mode<synchronous>, transform_indices = @transform_14, window_bounds = array<i64: 1, 128>}, {transform_indices = @transform_15, window_bounds = array<i64: 8, 128>}, {transform_indices = @transform_16, window_bounds = array<i64: 8, 128>}, {transform_indices = @transform_17, window_bounds = array<i64: 8, 128>}, {transform_indices = @transform_18, window_bounds = array<i64: 8, 128>}, {transform_indices = @transform_19, window_bounds = array<i64: 8, 128>}]} {
    %c0 = arith.constant 0 : index
    %c0_0 = arith.constant 0 : index
    %0 = vector.load %arg1[%c0, %c0_0] : memref<8x48xf32, #tpu.memory_space<vmem>>, vector<8x48xf32>
    %c0_1 = arith.constant 0 : index
    %c0_2 = arith.constant 0 : index
    %1 = vector.load %arg2[%c0_1, %c0_2] : memref<8x16xf32, #tpu.memory_space<vmem>>, vector<8x16xf32>
    %c0_3 = arith.constant 0 : index
    %c0_4 = arith.constant 0 : index
    %2 = vector.load %arg3[%c0_3, %c0_4] : memref<8x128xf32, #tpu.memory_space<vmem>>, vector<8x128xf32>
    %3 = arith.truncf %0 : vector<8x48xf32> to vector<8x48xbf16>
    %c0_5 = arith.constant 0 : index
    %c0_6 = arith.constant 0 : index
    %4 = vector.load %arg4[%c0_5, %c0_6] : memref<48x128xbf16, #tpu.memory_space<vmem>>, vector<48x128xbf16>
    %cst = arith.constant dense<0.000000e+00> : vector<8x128xf32>
    %5 = tpu.matmul %3, %4, %cst {dimension_numbers = #tpu.dot_dimension_numbers<[1], [0], [0], [1], [0, 0, 1, 1], [], []>} : vector<8x48xbf16>, vector<48x128xbf16>, vector<8x128xf32> -> vector<8x128xf32>
    %c0_7 = arith.constant 0 : index
    %c0_8 = arith.constant 0 : index
    %6 = vector.load %arg5[%c0_7, %c0_8] : memref<1x128xf32, #tpu.memory_space<vmem>>, vector<1x128xf32>
    %7 = vector.broadcast %6 : vector<1x128xf32> to vector<8x128xf32>
    %8 = arith.addf %5, %7 : vector<8x128xf32>
    %cst_9 = arith.constant 0.000000e+00 : f32
    %9 = vector.broadcast %cst_9 : f32 to vector<8x128xf32>
    %10 = arith.maximumf %8, %9 : vector<8x128xf32>
    %11 = arith.truncf %10 : vector<8x128xf32> to vector<8x128xbf16>
    %c0_10 = arith.constant 0 : index
    %c0_11 = arith.constant 0 : index
    %12 = vector.load %arg6[%c0_10, %c0_11] : memref<128x128xbf16, #tpu.memory_space<vmem>>, vector<128x128xbf16>
    %cst_12 = arith.constant dense<0.000000e+00> : vector<8x128xf32>
    %13 = tpu.matmul %11, %12, %cst_12 {dimension_numbers = #tpu.dot_dimension_numbers<[1], [0], [0], [1], [0, 0, 1, 1], [], []>} : vector<8x128xbf16>, vector<128x128xbf16>, vector<8x128xf32> -> vector<8x128xf32>
    %c0_13 = arith.constant 0 : index
    %c0_14 = arith.constant 0 : index
    %14 = vector.load %arg7[%c0_13, %c0_14] : memref<1x128xf32, #tpu.memory_space<vmem>>, vector<1x128xf32>
    %15 = vector.broadcast %14 : vector<1x128xf32> to vector<8x128xf32>
    %16 = arith.addf %13, %15 : vector<8x128xf32>
    %17 = tpu.iota {dimensions = array<i32: 1>} : vector<8x128xi32>
    %c16_i32 = arith.constant 16 : i32
    %18 = vector.broadcast %c16_i32 : i32 to vector<8x128xi32>
    %19 = arith.cmpi slt, %17, %18 : vector<8x128xi32>
    %cst_15 = arith.constant -1.000000e+30 : f32
    %20 = vector.broadcast %cst_15 : f32 to vector<8x128xf32>
    %21 = arith.select %19, %16, %20 : vector<8x128xi1>, vector<8x128xf32>
    %cst_16 = arith.constant dense<0xFF800000> : vector<8xf32>
    %22 = vector.multi_reduction <maximumf>, %21, %cst_16 [1] : vector<8x128xf32> to vector<8xf32>
    %23 = vector.shape_cast %22 : vector<8xf32> to vector<8x1xf32>
    %24 = vector.broadcast %23 : vector<8x1xf32> to vector<8x128xf32>
    %25 = arith.subf %21, %24 : vector<8x128xf32>
    %26 = math.exp %25 : vector<8x128xf32>
    %cst_17 = arith.constant dense<0.000000e+00> : vector<8xf32>
    %27 = vector.multi_reduction <add>, %26, %cst_17 [1] : vector<8x128xf32> to vector<8xf32>
    %28 = vector.shape_cast %27 : vector<8xf32> to vector<8x1xf32>
    %29 = tpu.reciprocal %28 {approx = true} : vector<8x1xf32> -> vector<8x1xf32>
    %30 = arith.mulf %28, %29 : vector<8x1xf32>
    %cst_18 = arith.constant 2.000000e+00 : f32
    %31 = vector.broadcast %cst_18 : f32 to vector<8x1xf32>
    %32 = arith.subf %31, %30 : vector<8x1xf32>
    %33 = arith.mulf %29, %32 : vector<8x1xf32>
    %34 = vector.broadcast %33 : vector<8x1xf32> to vector<8x128xf32>
    %35 = arith.mulf %26, %34 : vector<8x128xf32>
    %36 = vector.broadcast %23 : vector<8x1xf32> to vector<8x128xf32>
    %37 = arith.subf %21, %36 : vector<8x128xf32>
    %38 = math.log %28 : vector<8x1xf32>
    %39 = vector.broadcast %38 : vector<8x1xf32> to vector<8x128xf32>
    %40 = arith.subf %37, %39 : vector<8x128xf32>
    %41 = arith.addf %40, %2 : vector<8x128xf32>
    %cst_19 = arith.constant 1.49253726 : f32
    %42 = vector.broadcast %cst_19 : f32 to vector<8x128xf32>
    %43 = arith.mulf %41, %42 : vector<8x128xf32>
    %cst_20 = arith.constant -1.000000e+30 : f32
    %44 = vector.broadcast %cst_20 : f32 to vector<8x128xf32>
    %45 = arith.select %19, %43, %44 : vector<8x128xi1>, vector<8x128xf32>
    %cst_21 = arith.constant dense<0xFF800000> : vector<8xf32>
    %46 = vector.multi_reduction <maximumf>, %45, %cst_21 [1] : vector<8x128xf32> to vector<8xf32>
    %47 = vector.shape_cast %46 : vector<8xf32> to vector<8x1xf32>
    %48 = vector.broadcast %47 : vector<8x1xf32> to vector<8x128xf32>
    %49 = arith.subf %45, %48 : vector<8x128xf32>
    %50 = math.exp %49 : vector<8x128xf32>
    %cst_22 = arith.constant dense<0.000000e+00> : vector<8xf32>
    %51 = vector.multi_reduction <add>, %50, %cst_22 [1] : vector<8x128xf32> to vector<8xf32>
    %52 = vector.shape_cast %51 : vector<8xf32> to vector<8x1xf32>
    %53 = tpu.reciprocal %52 {approx = true} : vector<8x1xf32> -> vector<8x1xf32>
    %54 = arith.mulf %52, %53 : vector<8x1xf32>
    %cst_23 = arith.constant 2.000000e+00 : f32
    %55 = vector.broadcast %cst_23 : f32 to vector<8x1xf32>
    %56 = arith.subf %55, %54 : vector<8x1xf32>
    %57 = arith.mulf %53, %56 : vector<8x1xf32>
    %58 = vector.broadcast %57 : vector<8x1xf32> to vector<8x128xf32>
    %59 = arith.mulf %50, %58 : vector<8x128xf32>
    %60 = arith.truncf %1 : vector<8x16xf32> to vector<8x16xbf16>
    %c0_24 = arith.constant 0 : index
    %c0_25 = arith.constant 0 : index
    %61 = vector.load %arg8[%c0_24, %c0_25] : memref<16x128xbf16, #tpu.memory_space<vmem>>, vector<16x128xbf16>
    %cst_26 = arith.constant dense<0.000000e+00> : vector<8x128xf32>
    %62 = tpu.matmul %60, %61, %cst_26 {dimension_numbers = #tpu.dot_dimension_numbers<[1], [0], [0], [1], [0, 0, 1, 1], [], []>} : vector<8x16xbf16>, vector<16x128xbf16>, vector<8x128xf32> -> vector<8x128xf32>
    %c0_27 = arith.constant 0 : index
    %c0_28 = arith.constant 0 : index
    %63 = vector.load %arg9[%c0_27, %c0_28] : memref<1x128xf32, #tpu.memory_space<vmem>>, vector<1x128xf32>
    %64 = vector.broadcast %63 : vector<1x128xf32> to vector<8x128xf32>
    %65 = arith.addf %62, %64 : vector<8x128xf32>
    %cst_29 = arith.constant 0.000000e+00 : f32
    %66 = vector.broadcast %cst_29 : f32 to vector<8x128xf32>
    %67 = arith.maximumf %65, %66 : vector<8x128xf32>
    %68 = arith.truncf %67 : vector<8x128xf32> to vector<8x128xbf16>
    %c0_30 = arith.constant 0 : index
    %c0_31 = arith.constant 0 : index
    %69 = vector.load %arg10[%c0_30, %c0_31] : memref<128x128xbf16, #tpu.memory_space<vmem>>, vector<128x128xbf16>
    %cst_32 = arith.constant dense<0.000000e+00> : vector<8x128xf32>
    %70 = tpu.matmul %68, %69, %cst_32 {dimension_numbers = #tpu.dot_dimension_numbers<[1], [0], [0], [1], [0, 0, 1, 1], [], []>} : vector<8x128xbf16>, vector<128x128xbf16>, vector<8x128xf32> -> vector<8x128xf32>
    %c0_33 = arith.constant 0 : index
    %c0_34 = arith.constant 0 : index
    %71 = vector.load %arg11[%c0_33, %c0_34] : memref<1x128xf32, #tpu.memory_space<vmem>>, vector<1x128xf32>
    %72 = vector.broadcast %71 : vector<1x128xf32> to vector<8x128xf32>
    %73 = arith.addf %70, %72 : vector<8x128xf32>
    %cst_35 = arith.constant -1.000000e+30 : f32
    %74 = vector.broadcast %cst_35 : f32 to vector<8x128xf32>
    %75 = arith.select %19, %73, %74 : vector<8x128xi1>, vector<8x128xf32>
    %cst_36 = arith.constant dense<0xFF800000> : vector<8xf32>
    %76 = vector.multi_reduction <maximumf>, %75, %cst_36 [1] : vector<8x128xf32> to vector<8xf32>
    %77 = vector.shape_cast %76 : vector<8xf32> to vector<8x1xf32>
    %78 = vector.broadcast %77 : vector<8x1xf32> to vector<8x128xf32>
    %79 = arith.subf %75, %78 : vector<8x128xf32>
    %80 = math.exp %79 : vector<8x128xf32>
    %cst_37 = arith.constant dense<0.000000e+00> : vector<8xf32>
    %81 = vector.multi_reduction <add>, %80, %cst_37 [1] : vector<8x128xf32> to vector<8xf32>
    %82 = vector.shape_cast %81 : vector<8xf32> to vector<8x1xf32>
    %83 = tpu.reciprocal %82 {approx = true} : vector<8x1xf32> -> vector<8x1xf32>
    %84 = arith.mulf %82, %83 : vector<8x1xf32>
    %cst_38 = arith.constant 2.000000e+00 : f32
    %85 = vector.broadcast %cst_38 : f32 to vector<8x1xf32>
    %86 = arith.subf %85, %84 : vector<8x1xf32>
    %87 = arith.mulf %83, %86 : vector<8x1xf32>
    %88 = vector.broadcast %87 : vector<8x1xf32> to vector<8x128xf32>
    %89 = arith.mulf %80, %88 : vector<8x128xf32>
    %90 = arith.truncf %59 : vector<8x128xf32> to vector<8x128xbf16>
    %c0_39 = arith.constant 0 : index
    %c0_40 = arith.constant 0 : index
    %91 = vector.load %arg12[%c0_39, %c0_40] : memref<128x128xbf16, #tpu.memory_space<vmem>>, vector<128x128xbf16>
    %cst_41 = arith.constant dense<0.000000e+00> : vector<8x128xf32>
    %92 = tpu.matmul %90, %91, %cst_41 {dimension_numbers = #tpu.dot_dimension_numbers<[1], [0], [0], [1], [0, 0, 1, 1], [], []>} : vector<8x128xbf16>, vector<128x128xbf16>, vector<8x128xf32> -> vector<8x128xf32>
    %c0_42 = arith.constant 0 : index
    %c0_43 = arith.constant 0 : index
    %93 = vector.load %arg13[%c0_42, %c0_43] : memref<1x128xf32, #tpu.memory_space<vmem>>, vector<1x128xf32>
    %94 = vector.broadcast %93 : vector<1x128xf32> to vector<8x128xf32>
    %95 = arith.addf %92, %94 : vector<8x128xf32>
    %cst_44 = arith.constant 0.000000e+00 : f32
    %96 = vector.broadcast %cst_44 : f32 to vector<8x128xf32>
    %97 = arith.maximumf %95, %96 : vector<8x128xf32>
    %98 = arith.truncf %97 : vector<8x128xf32> to vector<8x128xbf16>
    %c0_45 = arith.constant 0 : index
    %c0_46 = arith.constant 0 : index
    %99 = vector.load %arg14[%c0_45, %c0_46] : memref<128x128xbf16, #tpu.memory_space<vmem>>, vector<128x128xbf16>
    %cst_47 = arith.constant dense<0.000000e+00> : vector<8x128xf32>
    %100 = tpu.matmul %98, %99, %cst_47 {dimension_numbers = #tpu.dot_dimension_numbers<[1], [0], [0], [1], [0, 0, 1, 1], [], []>} : vector<8x128xbf16>, vector<128x128xbf16>, vector<8x128xf32> -> vector<8x128xf32>
    %c0_48 = arith.constant 0 : index
    %c0_49 = arith.constant 0 : index
    %101 = vector.load %arg15[%c0_48, %c0_49] : memref<1x128xf32, #tpu.memory_space<vmem>>, vector<1x128xf32>
    %102 = vector.broadcast %101 : vector<1x128xf32> to vector<8x128xf32>
    %103 = arith.addf %100, %102 : vector<8x128xf32>
    %cst_50 = arith.constant 5.000000e-01 : f32
    %104 = vector.broadcast %cst_50 : f32 to vector<8x128xf32>
    %105 = arith.mulf %104, %103 : vector<8x128xf32>
    %106 = math.tanh %105 : vector<8x128xf32>
    %cst_51 = arith.constant 1.000000e+00 : f32
    %107 = vector.broadcast %cst_51 : f32 to vector<8x128xf32>
    %108 = arith.addf %106, %107 : vector<8x128xf32>
    %cst_52 = arith.constant 5.000000e-01 : f32
    %109 = vector.broadcast %cst_52 : f32 to vector<8x128xf32>
    %110 = arith.mulf %109, %108 : vector<8x128xf32>
    %c0_53 = arith.constant 0 : index
    %c0_54 = arith.constant 0 : index
    %111 = vector.load %arg16[%c0_53, %c0_54] : memref<8x128xf32, #tpu.memory_space<vmem>>, vector<8x128xf32>
    tpu.vector_store %arg16[%c0_53, %c0_54], %110 {strides = array<i32>} : memref<8x128xf32, #tpu.memory_space<vmem>>, vector<8x128xf32>,
    %c0_55 = arith.constant 0 : index
    %c0_56 = arith.constant 0 : index
    %112 = vector.load %arg17[%c0_55, %c0_56] : memref<8x128xf32, #tpu.memory_space<vmem>>, vector<8x128xf32>
    tpu.vector_store %arg17[%c0_55, %c0_56], %35 {strides = array<i32>} : memref<8x128xf32, #tpu.memory_space<vmem>>, vector<8x128xf32>,
    %c0_57 = arith.constant 0 : index
    %c0_58 = arith.constant 0 : index
    %113 = vector.load %arg18[%c0_57, %c0_58] : memref<8x128xf32, #tpu.memory_space<vmem>>, vector<8x128xf32>
    tpu.vector_store %arg18[%c0_57, %c0_58], %89 {strides = array<i32>} : memref<8x128xf32, #tpu.memory_space<vmem>>, vector<8x128xf32>,
    %c0_59 = arith.constant 0 : index
    %c0_60 = arith.constant 0 : index
    %114 = vector.load %arg19[%c0_59, %c0_60] : memref<8x128xf32, #tpu.memory_space<vmem>>, vector<8x128xf32>
    tpu.vector_store %arg19[%c0_59, %c0_60], %59 {strides = array<i32>} : memref<8x128xf32, #tpu.memory_space<vmem>>, vector<8x128xf32>,
    %c0_61 = arith.constant 0 : index
    %c0_62 = arith.constant 0 : index
    %115 = vector.load %arg20[%c0_61, %c0_62] : memref<8x128xf32, #tpu.memory_space<vmem>>, vector<8x128xf32>
    tpu.vector_store %arg20[%c0_61, %c0_62], %67 {strides = array<i32>} : memref<8x128xf32, #tpu.memory_space<vmem>>, vector<8x128xf32>,
    return
  }
  func.func @transform_0(%arg0: i32) -> (i32, i32) {
    %c0_i32 = arith.constant 0 : i32
    %c0_i32_0 = arith.constant 0 : i32
    return %arg0, %c0_i32 : i32, i32
  }
  func.func @transform_1(%arg0: i32) -> (i32, i32) {
    %c0_i32 = arith.constant 0 : i32
    %c0_i32_0 = arith.constant 0 : i32
    return %arg0, %c0_i32 : i32, i32
  }
  func.func @transform_2(%arg0: i32) -> (i32, i32) {
    %c0_i32 = arith.constant 0 : i32
    %c0_i32_0 = arith.constant 0 : i32
    return %arg0, %c0_i32 : i32, i32
  }
  func.func @transform_3(%arg0: i32) -> (i32, i32) {
    %c0_i32 = arith.constant 0 : i32
    %c0_i32_0 = arith.constant 0 : i32
    %c0_i32_1 = arith.constant 0 : i32
    return %c0_i32, %c0_i32_0 : i32, i32
  }
  func.func @transform_4(%arg0: i32) -> (i32, i32) {
    %c0_i32 = arith.constant 0 : i32
    %c0_i32_0 = arith.constant 0 : i32
    %c0_i32_1 = arith.constant 0 : i32
    return %c0_i32, %c0_i32_0 : i32, i32
  }
  func.func @transform_5(%arg0: i32) -> (i32, i32) {
    %c0_i32 = arith.constant 0 : i32
    %c0_i32_0 = arith.constant 0 : i32
    %c0_i32_1 = arith.constant 0 : i32
    return %c0_i32, %c0_i32_0 : i32, i32
  }
  func.func @transform_6(%arg0: i32) -> (i32, i32) {
    %c0_i32 = arith.constant 0 : i32
    %c0_i32_0 = arith.constant 0 : i32
    %c0_i32_1 = arith.constant 0 : i32
    return %c0_i32, %c0_i32_0 : i32, i32
  }
  func.func @transform_7(%arg0: i32) -> (i32, i32) {
    %c0_i32 = arith.constant 0 : i32
    %c0_i32_0 = arith.constant 0 : i32
    %c0_i32_1 = arith.constant 0 : i32
    return %c0_i32, %c0_i32_0 : i32, i32
  }
  func.func @transform_8(%arg0: i32) -> (i32, i32) {
    %c0_i32 = arith.constant 0 : i32
    %c0_i32_0 = arith.constant 0 : i32
    %c0_i32_1 = arith.constant 0 : i32
    return %c0_i32, %c0_i32_0 : i32, i32
  }
  func.func @transform_9(%arg0: i32) -> (i32, i32) {
    %c0_i32 = arith.constant 0 : i32
    %c0_i32_0 = arith.constant 0 : i32
    %c0_i32_1 = arith.constant 0 : i32
    return %c0_i32, %c0_i32_0 : i32, i32
  }
  func.func @transform_10(%arg0: i32) -> (i32, i32) {
    %c0_i32 = arith.constant 0 : i32
    %c0_i32_0 = arith.constant 0 : i32
    %c0_i32_1 = arith.constant 0 : i32
    return %c0_i32, %c0_i32_0 : i32, i32
  }
  func.func @transform_11(%arg0: i32) -> (i32, i32) {
    %c0_i32 = arith.constant 0 : i32
    %c0_i32_0 = arith.constant 0 : i32
    %c0_i32_1 = arith.constant 0 : i32
    return %c0_i32, %c0_i32_0 : i32, i32
  }
  func.func @transform_12(%arg0: i32) -> (i32, i32) {
    %c0_i32 = arith.constant 0 : i32
    %c0_i32_0 = arith.constant 0 : i32
    %c0_i32_1 = arith.constant 0 : i32
    return %c0_i32, %c0_i32_0 : i32, i32
  }
  func.func @transform_13(%arg0: i32) -> (i32, i32) {
    %c0_i32 = arith.constant 0 : i32
    %c0_i32_0 = arith.constant 0 : i32
    %c0_i32_1 = arith.constant 0 : i32
    return %c0_i32, %c0_i32_0 : i32, i32
  }
  func.func @transform_14(%arg0: i32) -> (i32, i32) {
    %c0_i32 = arith.constant 0 : i32
    %c0_i32_0 = arith.constant 0 : i32
    %c0_i32_1 = arith.constant 0 : i32
    return %c0_i32, %c0_i32_0 : i32, i32
  }
  func.func @transform_15(%arg0: i32) -> (i32, i32) {
    %c0_i32 = arith.constant 0 : i32
    %c0_i32_0 = arith.constant 0 : i32
    return %arg0, %c0_i32 : i32, i32
  }
  func.func @transform_16(%arg0: i32) -> (i32, i32) {
    %c0_i32 = arith.constant 0 : i32
    %c0_i32_0 = arith.constant 0 : i32
    return %arg0, %c0_i32 : i32, i32
  }
  func.func @transform_17(%arg0: i32) -> (i32, i32) {
    %c0_i32 = arith.constant 0 : i32
    %c0_i32_0 = arith.constant 0 : i32
    return %arg0, %c0_i32 : i32, i32
  }
  func.func @transform_18(%arg0: i32) -> (i32, i32) {
    %c0_i32 = arith.constant 0 : i32
    %c0_i32_0 = arith.constant 0 : i32
    return %arg0, %c0_i32 : i32, i32
  }
  func.func @transform_19(%arg0: i32) -> (i32, i32) {
    %c0_i32 = arith.constant 0 : i32
    %c0_i32_0 = arith.constant 0 : i32
    return %arg0, %c0_i32 : i32, i32
  }
}

</mosaic_0001>

<llo_original>
// kernel: forward.1
$region0: #{forward.1}
  #allocation0 [shape = 'u32[]', space=smem, size = 0x4, offset = 0x4, fixed_abs, tag = 'smem constant byte address 0x4 - core index']
  #allocation1 [shape = 'u32[144,128]{1,0:T(1,128)}', space=vmem, size = 0x12000, scoped, tag = 'internal scratch']
  %s0 = inlined_call_operand.vmem [shape: f32[8,48], index: 0, kind: input, shape index: {}]
  %s1 = inlined_call_operand.vmem [shape: f32[8,16], index: 1, kind: input, shape index: {}]
  %s2 = inlined_call_operand.vmem [shape: f32[8,128], index: 2, kind: input, shape index: {}]
  %s3 = inlined_call_operand.hbm [shape: bf16[48,128], index: 3, kind: input, shape index: {}]
  %s4 = inlined_call_operand.hbm [shape: f32[1,128], index: 4, kind: input, shape index: {}]
  %s5 = inlined_call_operand.hbm [shape: bf16[128,128], index: 5, kind: input, shape index: {}]
  %s6 = inlined_call_operand.hbm [shape: f32[1,128], index: 6, kind: input, shape index: {}]
  %s7 = inlined_call_operand.hbm [shape: bf16[16,128], index: 7, kind: input, shape index: {}]
  %s8 = inlined_call_operand.hbm [shape: f32[1,128], index: 8, kind: input, shape index: {}]
  %s9 = inlined_call_operand.hbm [shape: bf16[128,128], index: 9, kind: input, shape index: {}]
  %s10 = inlined_call_operand.hbm [shape: f32[1,128], index: 10, kind: input, shape index: {}]
  %s11 = inlined_call_operand.vmem [shape: bf16[128,128], index: 11, kind: input, shape index: {}]
  %s12 = inlined_call_operand.hbm [shape: f32[1,128], index: 12, kind: input, shape index: {}]
  %s13 = inlined_call_operand.vmem [shape: bf16[128,128], index: 13, kind: input, shape index: {}]
  %s14 = inlined_call_operand.vmem [shape: f32[1,128], index: 14, kind: input, shape index: {}]
  %s15 = inlined_call_operand.hbm [shape: f32[8,128], index: 15, kind: output, shape index: {0}]
  %s16 = inlined_call_operand.hbm [shape: f32[8,128], index: 16, kind: output, shape index: {1}]
  %s17 = inlined_call_operand.hbm [shape: f32[8,128], index: 17, kind: output, shape index: {2}]
  %s18 = inlined_call_operand.hbm [shape: f32[8,128], index: 18, kind: output, shape index: {3}]
  %s19 = inlined_call_operand.hbm [shape: f32[8,128], index: 19, kind: output, shape index: {4}]
  %20 = xla_tuple %s15, %s16, %s17, %s18, %s19
  %s21 = sld [smem:[#allocation0]]
  $region138: #{forward.1} parent=0
    _
  %s23 = ssub.s32 1, %s21
  %s24 = scalar_select 0, %s23, %s21
  $region1: #{forward.1} parent=0
    #allocation2 [shape = 'u8[12288]{0}', space=vmem, size = 0x3000, scoped, tag = 'input window, operand 3, single buffered']
    #allocation3 [shape = 's32[1]{0}', space=sflag, size = 0x4, scoped, tag = 'scoped memory for forward.1']
    #allocation4 [shape = 's32[1]{0}', space=sflag, size = 0x4, scoped, tag = 'scoped memory for forward.1']
    #allocation5 [shape = 'u8[512]{0}', space=vmem, size = 0x400, scoped, tag = 'input window, operand 4, single buffered']
    #allocation6 [shape = 's32[1]{0}', space=sflag, size = 0x4, scoped, tag = 'scoped memory for forward.1']
    #allocation7 [shape = 'u8[32768]{0}', space=vmem, size = 0x8000, scoped, tag = 'input window, operand 5, single buffered']
    #allocation8 [shape = 'u8[512]{0}', space=vmem, size = 0x400, scoped, tag = 'input window, operand 6, single buffered']
    #allocation9 [shape = 's32[1]{0}', space=sflag, size = 0x4, scoped, tag = 'scoped memory for forward.1']
    #allocation10 [shape = 'u8[4096]{0}', space=vmem, size = 0x1000, scoped, tag = 'input window, operand 7, single buffered']
    #allocation11 [shape = 'u8[512]{0}', space=vmem, size = 0x400, scoped, tag = 'input window, operand 8, single buffered']
    #allocation12 [shape = 's32[1]{0}', space=sflag, size = 0x4, scoped, tag = 'scoped memory for forward.1']
    #allocation13 [shape = 'u8[32768]{0}', space=vmem, size = 0x8000, scoped, tag = 'input window, operand 9, single buffered']
    #allocation14 [shape = 'u8[512]{0}', space=vmem, size = 0x400, scoped, tag = 'input window, operand 10, single buffered']
    #allocation15 [shape = 's32[1]{0}', space=sflag, size = 0x4, scoped, tag = 'scoped memory for forward.1']
    #allocation16 [shape = 'u8[512]{0}', space=vmem, size = 0x400, scoped, tag = 'input window, operand 12, single buffered']
    #allocation17 [shape = 'u8[4096]{0}', space=vmem, size = 0x1000, scoped, tag = 'output window, operand 0, single buffered']
    #allocation18 [shape = 'u8[4096]{0}', space=vmem, size = 0x1000, scoped, tag = 'output window, operand 1, single buffered']
    #allocation19 [shape = 's32[1]{0}', space=sflag, size = 0x4, scoped, tag = 'scoped memory for forward.1']
    #allocation20 [shape = 'u8[4096]{0}', space=vmem, size = 0x1000, scoped, tag = 'output window, operand 2, single buffered']
    #allocation21 [shape = 'u8[4096]{0}', space=vmem, size = 0x1000, scoped, tag = 'output window, operand 3, single buffered']
    #allocation22 [shape = 's32[1]{0}', space=sflag, size = 0x4, scoped, tag = 'scoped memory for forward.1']
    #allocation23 [shape = 'u8[4096]{0}', space=vmem, size = 0x1000, scoped, tag = 'output window, operand 4, single buffered']
    %25 = vsyncpa [#allocation3], 0
    %26 = vsyncpa [#allocation6], 0
    %27 = vsyncpa [#allocation9], 0
    %28 = vsyncpa [#allocation12], 0
    %29 = vsyncpa [#allocation15], 0
    %30 = vsyncpa [#allocation4], 0
    %31 = vsyncpa [#allocation19], 0
    %32 = vsyncpa [#allocation22], 0
    // Predicated region
    $region2: #{forward.1} parent=1 // pred_check
      _
    $region3: #{forward.1} parent=1 // pred_check_branch
      %34 = sbr.rel (0) target = $region5
    $region4: #{forward.1} parent=1 // pred_region
      _
    $region5: #{forward.1} parent=1 // pred_fallthru
      _
    // Predicated region
    $region6: #{forward.1} parent=1 // pred_check
      _
    $region7: #{forward.1} parent=1 // pred_check_branch
      %36 = sbr.rel (0) target = $region9
    $region8: #{forward.1} parent=1 // pred_region
      _
    $region9: #{forward.1} parent=1 // pred_fallthru
      _
    // Predicated region
    $region10: #{forward.1} parent=1 // pred_check
      _
    $region11: #{forward.1} parent=1 // pred_check_branch
      %38 = sbr.rel (0) target = $region13
    $region12: #{forward.1} parent=1 // pred_region
      _
    $region13: #{forward.1} parent=1 // pred_fallthru
      _
    // Predicated region
    $region14: #{forward.1} parent=1 // pred_check
      _
    $region15: #{forward.1} parent=1 // pred_check_branch
      %40 = sbr.rel (0) target = $region17
    $region16: #{forward.1} parent=1 // pred_region
      %s42 = ssub.s32 384, 384
      %43 = vsyncadd [#allocation3], %s42
      %s44 = sshll.u32 [#allocation2], 4
      %s45 = int_to_ptr.vmem [resolvable:$true] %s44
      %50 = dma.hbm_to_vmem [thread:$0]  %s3, 384, %s45, [#allocation3], 64, 64, 4
    $region17: #{forward.1} parent=1 // pred_fallthru
      _
    // Predicated region
    $region18: #{forward.1} parent=1 // pred_check
      _
    $region19: #{forward.1} parent=1 // pred_check_branch
      %52 = sbr.rel (0) target = $region21
    $region20: #{forward.1} parent=1 // pred_region
      %s54 = ssub.s32 16, 16
      %55 = vsyncadd [#allocation6], %s54
      %s57 = sshll.u32 [#allocation5], 4
      %s58 = int_to_ptr.vmem [resolvable:$true] %s57
      %60 = dma.hbm_to_vmem [thread:$0]  %s4, 16, %s58, [#allocation6]
    $region21: #{forward.1} parent=1 // pred_fallthru
      _
    // Predicated region
    $region22: #{forward.1} parent=1 // pred_check
      _
    $region23: #{forward.1} parent=1 // pred_check_branch
      %62 = sbr.rel (0) target = $region25
    $region24: #{forward.1} parent=1 // pred_region
      %s64 = ssub.s32 1024, 1024
      %65 = vsyncadd [#allocation6], %s64
      %s66 = sshll.u32 [#allocation7], 4
      %s67 = int_to_ptr.vmem [resolvable:$true] %s66
      %72 = dma.hbm_to_vmem [thread:$0]  %s5, 1024, %s67, [#allocation6], 64, 64, 4
    $region25: #{forward.1} parent=1 // pred_fallthru
      _
    // Predicated region
    $region26: #{forward.1} parent=1 // pred_check
      _
    $region27: #{forward.1} parent=1 // pred_check_branch
      %74 = sbr.rel (0) target = $region29
    $region28: #{forward.1} parent=1 // pred_region
      %s76 = ssub.s32 16, 16
      %77 = vsyncadd [#allocation9], %s76
      %s79 = sshll.u32 [#allocation8], 4
      %s80 = int_to_ptr.vmem [resolvable:$true] %s79
      %82 = dma.hbm_to_vmem [thread:$0]  %s6, 16, %s80, [#allocation9]
    $region29: #{forward.1} parent=1 // pred_fallthru
      _
    // Predicated region
    $region30: #{forward.1} parent=1 // pred_check
      _
    $region31: #{forward.1} parent=1 // pred_check_branch
      %84 = sbr.rel (0) target = $region33
    $region32: #{forward.1} parent=1 // pred_region
      %s86 = ssub.s32 128, 128
      %87 = vsyncadd [#allocation9], %s86
      %s88 = sshll.u32 [#allocation10], 4
      %s89 = int_to_ptr.vmem [resolvable:$true] %s88
      %94 = dma.hbm_to_vmem [thread:$0]  %s7, 128, %s89, [#allocation9], 64, 64, 4
    $region33: #{forward.1} parent=1 // pred_fallthru
      _
    // Predicated region
    $region34: #{forward.1} parent=1 // pred_check
      _
    $region35: #{forward.1} parent=1 // pred_check_branch
      %96 = sbr.rel (0) target = $region37
    $region36: #{forward.1} parent=1 // pred_region
      %s98 = ssub.s32 16, 16
      %99 = vsyncadd [#allocation12], %s98
      %s101 = sshll.u32 [#allocation11], 4
      %s102 = int_to_ptr.vmem [resolvable:$true] %s101
      %104 = dma.hbm_to_vmem [thread:$0]  %s8, 16, %s102, [#allocation12]
    $region37: #{forward.1} parent=1 // pred_fallthru
      _
    // Predicated region
    $region38: #{forward.1} parent=1 // pred_check
      _
    $region39: #{forward.1} parent=1 // pred_check_branch
      %106 = sbr.rel (0) target = $region41
    $region40: #{forward.1} parent=1 // pred_region
      %s108 = ssub.s32 1024, 1024
      %109 = vsyncadd [#allocation12], %s108
      %s110 = sshll.u32 [#allocation13], 4
      %s111 = int_to_ptr.vmem [resolvable:$true] %s110
      %116 = dma.hbm_to_vmem [thread:$0]  %s9, 1024, %s111, [#allocation12], 64, 64, 4
    $region41: #{forward.1} parent=1 // pred_fallthru
      _
    // Predicated region
    $region42: #{forward.1} parent=1 // pred_check
      _
    $region43: #{forward.1} parent=1 // pred_check_branch
      %118 = sbr.rel (0) target = $region45
    $region44: #{forward.1} parent=1 // pred_region
      %s120 = ssub.s32 16, 16
      %121 = vsyncadd [#allocation15], %s120
      %s123 = sshll.u32 [#allocation14], 4
      %s124 = int_to_ptr.vmem [resolvable:$true] %s123
      %126 = dma.hbm_to_vmem [thread:$0]  %s10, 16, %s124, [#allocation15]
    $region45: #{forward.1} parent=1 // pred_fallthru
      _
    // Predicated region
    $region46: #{forward.1} parent=1 // pred_check
      _
    $region47: #{forward.1} parent=1 // pred_check_branch
      %128 = sbr.rel (0) target = $region49
    $region48: #{forward.1} parent=1 // pred_region
      _
    $region49: #{forward.1} parent=1 // pred_fallthru
      _
    // Predicated region
    $region50: #{forward.1} parent=1 // pred_check
      _
    $region51: #{forward.1} parent=1 // pred_check_branch
      %130 = sbr.rel (0) target = $region53
    $region52: #{forward.1} parent=1 // pred_region
      %s132 = ssub.s32 16, 16
      %133 = vsyncadd [#allocation15], %s132
      %s135 = sshll.u32 [#allocation16], 4
      %s136 = int_to_ptr.vmem [resolvable:$true] %s135
      %138 = dma.hbm_to_vmem [thread:$0]  %s12, 16, %s136, [#allocation15]
    $region53: #{forward.1} parent=1 // pred_fallthru
      _
    // Predicated region
    $region54: #{forward.1} parent=1 // pred_check
      _
    $region55: #{forward.1} parent=1 // pred_check_branch
      %140 = sbr.rel (0) target = $region57
    $region56: #{forward.1} parent=1 // pred_region
      _
    $region57: #{forward.1} parent=1 // pred_fallthru
      _
    // Predicated region
    $region58: #{forward.1} parent=1 // pred_check
      _
    $region59: #{forward.1} parent=1 // pred_check_branch
      %142 = sbr.rel (0) target = $region61
    $region60: #{forward.1} parent=1 // pred_region
      _
    $region61: #{forward.1} parent=1 // pred_fallthru
      _
    // Predicated region
    $region62: #{forward.1} parent=1 // pred_check
      _
    $region63: #{forward.1} parent=1 // pred_check_branch
      %144 = sbr.rel (0) target = $region65
    $region64: #{forward.1} parent=1 // pred_region
      %145 = dma.done [#allocation3], 384
    $region65: #{forward.1} parent=1 // pred_fallthru
      _
    // Predicated region
    $region66: #{forward.1} parent=1 // pred_check
      _
    $region67: #{forward.1} parent=1 // pred_check_branch
      %147 = sbr.rel (0) target = $region69
    $region68: #{forward.1} parent=1 // pred_region
      %148 = dma.done [#allocation6], 16
    $region69: #{forward.1} parent=1 // pred_fallthru
      _
    // Predicated region
    $region70: #{forward.1} parent=1 // pred_check
      _
    $region71: #{forward.1} parent=1 // pred_check_branch
      %150 = sbr.rel (0) target = $region73
    $region72: #{forward.1} parent=1 // pred_region
      %151 = dma.done [#allocation6], 1024
    $region73: #{forward.1} parent=1 // pred_fallthru
      _
    // Predicated region
    $region74: #{forward.1} parent=1 // pred_check
      _
    $region75: #{forward.1} parent=1 // pred_check_branch
      %153 = sbr.rel (0) target = $region77
    $region76: #{forward.1} parent=1 // pred_region
      %154 = dma.done [#allocation9], 16
    $region77: #{forward.1} parent=1 // pred_fallthru
      _
    // Predicated region
    $region78: #{forward.1} parent=1 // pred_check
      _
    $region79: #{forward.1} parent=1 // pred_check_branch
      %156 = sbr.rel (0) target = $region81
    $region80: #{forward.1} parent=1 // pred_region
      %157 = dma.done [#allocation9], 128
    $region81: #{forward.1} parent=1 // pred_fallthru
      _
    // Predicated region
    $region82: #{forward.1} parent=1 // pred_check
      _
    $region83: #{forward.1} parent=1 // pred_check_branch
      %159 = sbr.rel (0) target = $region85
    $region84: #{forward.1} parent=1 // pred_region
      %160 = dma.done [#allocation12], 16
    $region85: #{forward.1} parent=1 // pred_fallthru
      _
    // Predicated region
    $region86: #{forward.1} parent=1 // pred_check
      _
    $region87: #{forward.1} parent=1 // pred_check_branch
      %162 = sbr.rel (0) target = $region89
    $region88: #{forward.1} parent=1 // pred_region
      %163 = dma.done [#allocation12], 1024
    $region89: #{forward.1} parent=1 // pred_fallthru
      _
    // Predicated region
    $region90: #{forward.1} parent=1 // pred_check
      _
    $region91: #{forward.1} parent=1 // pred_check_branch
      %165 = sbr.rel (0) target = $region93
    $region92: #{forward.1} parent=1 // pred_region
      %166 = dma.done [#allocation15], 16
    $region93: #{forward.1} parent=1 // pred_fallthru
      _
    // Predicated region
    $region94: #{forward.1} parent=1 // pred_check
      _
    $region95: #{forward.1} parent=1 // pred_check_branch
      %168 = sbr.rel (0) target = $region97
    $region96: #{forward.1} parent=1 // pred_region
      %169 = dma.done [#allocation15], 16
    $region97: #{forward.1} parent=1 // pred_fallthru
      _
    %v171 = vld [vmem:[%s0] sm:$0xff]
    %v172 = vld [vmem:[%s1] sm:$0xff]
    %v173 = vld [vmem:[%s2] sm:$0xff]
    %v174 = vpack.c.bf16 %v171, %v171
    %v175 = vld [vmem:[#allocation2] sm:$0xf]
    %v176 = vld [vmem:[#allocation2 + $0x4] sm:$0xf]
    %v177 = vld [vmem:[#allocation2 + $0x8] sm:$0xf]
    %v178 = vld [vmem:[#allocation2 + $0xc] sm:$0xf]
    %v179 = vld [vmem:[#allocation2 + $0x10] sm:$0xf]
    %v180 = vld [vmem:[#allocation2 + $0x14] sm:$0xf]
    %v181 = vld [vmem:[#allocation5] sm:$0x1]
    %v183 = vlaneseq
    %v184 = vshrl.u32 %v183, 7
    %v185 = vsub.s32 0, %v184
    %v186 = vrot.slane %v181, %v185
    %v194 = vunpack.c.l.b16 %v175
    %v195 = vunpack.c.l.b16 %v176
    %v196 = vunpack.c.l.b16 %v177
    %v197 = vunpack.c.l.b16 %v178
    %v198 = vunpack.c.l.b16 %v179
    %v199 = vunpack.c.l.b16 %v180
    %v200 = vpack.c.b16 %v195, %v194
    %v201 = vpack.c.b16 %v197, %v196
    %v202 = vpack.c.b16 %v199, %v198
    %vm206 = vcmask 392192
    %v208 = vsel %vm206, %v174, 0
    %210 = vmatprep.subr.bf16.mxu0 0
    %211 = vmatpush1.bf16.msra.mxu0 %v200
    %212 = vmatprep.subr.bf16.mxu0 0
    %213 = vmatpush1.bf16.msra.mxu0 %v201
    %214 = vmatprep.subr.bf16.mxu0 0
    %215 = vmatpush1.bf16.msra.mxu0 %v202
    %216 = vmatprep.subr.bf16.mxu0 0
    %217 = vmatpush1.bf16.msra.mxu0 0
    %218 = vmatprep.subr.bf16.mxu0 0
    %219 = vmatpush1.bf16.msra.mxu0 0
    %220 = vmatprep.subr.bf16.mxu0 0
    %221 = vmatpush1.bf16.msra.mxu0 0
    %222 = vmatprep.subr.bf16.mxu0 0
    %223 = vmatpush1.bf16.msra.mxu0 0
    %224 = vmatprep.subr.bf16.mxu0 0
    %225 = vmatpush1.bf16.msra.mxu0 0
    %226 = vmatprep.subr.bf16.mxu0 0
    %227 = vmatpush1.bf16.msra.mxu0 0
    %228 = vmatprep.subr.bf16.mxu0 0
    %229 = vmatpush1.bf16.msra.mxu0 0
    %230 = vmatprep.subr.bf16.mxu0 0
    %231 = vmatpush1.bf16.msra.mxu0 0
    %232 = vmatprep.subr.bf16.mxu0 0
    %233 = vmatpush1.bf16.msra.mxu0 0
    %234 = vmatprep.subr.bf16.mxu0 0
    %235 = vmatpush1.bf16.msra.mxu0 0
    %236 = vmatprep.subr.bf16.mxu0 0
    %237 = vmatpush1.bf16.msra.mxu0 0
    %238 = vmatprep.subr.bf16.mxu0 0
    %239 = vmatpush1.bf16.msra.mxu0 0
    %240 = vmatprep.subr.bf16.mxu0 0
    %241 = vmatpush1.bf16.msra.mxu0 0
    %242 = vmatprep.mubr.bf16.mxu0 0
    %243 = vmatmul.mubr.bf16.gmra.mrb[0].mxu0 %v208
    %v244 = vpop.f32.mrb[0].mxu0
    %v245 = vadd.f32 %v186, %v244
    %v246 = vpop.f32.mrb[0].mxu0
    %v247 = vpop.f32.mrb[0].mxu0
    %v248 = vpop.f32.mrb[0].mxu0
    %249 = vdwg.mxu0
    %v250 = vmax.f32 %v245, 0.0
    %v251 = vpack.c.bf16 %v250, %v250
    %v252 = vld [vmem:[#allocation7] sm:$0xf]
    %v253 = vld [vmem:[#allocation7 + $0x4] sm:$0xf]
    %v254 = vld [vmem:[#allocation7 + $0x8] sm:$0xf]
    %v255 = vld [vmem:[#allocation7 + $0xc] sm:$0xf]
    %v256 = vld [vmem:[#allocation7 + $0x10] sm:$0xf]
    %v257 = vld [vmem:[#allocation7 + $0x14] sm:$0xf]
    %v258 = vld [vmem:[#allocation7 + $0x18] sm:$0xf]
    %v259 = vld [vmem:[#allocation7 + $0x1c] sm:$0xf]
    %v260 = vld [vmem:[#allocation7 + $0x20] sm:$0xf]
    %v261 = vld [vmem:[#allocation7 + $0x24] sm:$0xf]
    %v262 = vld [vmem:[#allocation7 + $0x28] sm:$0xf]
    %v263 = vld [vmem:[#allocation7 + $0x2c] sm:$0xf]
    %v264 = vld [vmem:[#allocation7 + $0x30] sm:$0xf]
    %v265 = vld [vmem:[#allocation7 + $0x34] sm:$0xf]
    %v266 = vld [vmem:[#allocation7 + $0x38] sm:$0xf]
    %v267 = vld [vmem:[#allocation7 + $0x3c] sm:$0xf]
    %v268 = vld [vmem:[#allocation8] sm:$0x1]
    %v270 = vlaneseq
    %v271 = vshrl.u32 %v270, 7
    %v272 = vsub.s32 0, %v271
    %v273 = vrot.slane %v268, %v272
    %v291 = vunpack.c.l.b16 %v252
    %v292 = vunpack.c.l.b16 %v253
    %v293 = vunpack.c.l.b16 %v254
    %v294 = vunpack.c.l.b16 %v255
    %v295 = vunpack.c.l.b16 %v256
    %v296 = vunpack.c.l.b16 %v257
    %v297 = vunpack.c.l.b16 %v258
    %v298 = vunpack.c.l.b16 %v259
    %v299 = vunpack.c.l.b16 %v260
    %v300 = vunpack.c.l.b16 %v261
    %v301 = vunpack.c.l.b16 %v262
    %v302 = vunpack.c.l.b16 %v263
    %v303 = vunpack.c.l.b16 %v264
    %v304 = vunpack.c.l.b16 %v265
    %v305 = vunpack.c.l.b16 %v266
    %v306 = vunpack.c.l.b16 %v267
    %v307 = vpack.c.b16 %v292, %v291
    %v308 = vpack.c.b16 %v294, %v293
    %v309 = vpack.c.b16 %v296, %v295
    %v310 = vpack.c.b16 %v298, %v297
    %v311 = vpack.c.b16 %v300, %v299
    %v312 = vpack.c.b16 %v302, %v301
    %v313 = vpack.c.b16 %v304, %v303
    %v314 = vpack.c.b16 %v306, %v305
    %323 = vmatprep.subr.bf16.mxu0 0
    %324 = vmatpush1.bf16.msra.mxu0 %v307
    %325 = vmatprep.subr.bf16.mxu0 0
    %326 = vmatpush1.bf16.msra.mxu0 %v308
    %327 = vmatprep.subr.bf16.mxu0 0
    %328 = vmatpush1.bf16.msra.mxu0 %v309
    %329 = vmatprep.subr.bf16.mxu0 0
    %330 = vmatpush1.bf16.msra.mxu0 %v310
    %331 = vmatprep.subr.bf16.mxu0 0
    %332 = vmatpush1.bf16.msra.mxu0 %v311
    %333 = vmatprep.subr.bf16.mxu0 0
    %334 = vmatpush1.bf16.msra.mxu0 %v312
    %335 = vmatprep.subr.bf16.mxu0 0
    %336 = vmatpush1.bf16.msra.mxu0 %v313
    %337 = vmatprep.subr.bf16.mxu0 0
    %338 = vmatpush1.bf16.msra.mxu0 %v314
    %339 = vmatprep.subr.bf16.mxu0 0
    %340 = vmatpush1.bf16.msra.mxu0 0
    %341 = vmatprep.subr.bf16.mxu0 0
    %342 = vmatpush1.bf16.msra.mxu0 0
    %343 = vmatprep.subr.bf16.mxu0 0
    %344 = vmatpush1.bf16.msra.mxu0 0
    %345 = vmatprep.subr.bf16.mxu0 0
    %346 = vmatpush1.bf16.msra.mxu0 0
    %347 = vmatprep.subr.bf16.mxu0 0
    %348 = vmatpush1.bf16.msra.mxu0 0
    %349 = vmatprep.subr.bf16.mxu0 0
    %350 = vmatpush1.bf16.msra.mxu0 0
    %351 = vmatprep.subr.bf16.mxu0 0
    %352 = vmatpush1.bf16.msra.mxu0 0
    %353 = vmatprep.subr.bf16.mxu0 0
    %354 = vmatpush1.bf16.msra.mxu0 0
    %355 = vmatprep.mubr.bf16.mxu0 0
    %356 = vmatmul.mubr.bf16.gmra.mrb[0].mxu0 %v251
    %v357 = vpop.f32.mrb[0].mxu0
    %v358 = vadd.f32 %v273, %v357
    %v359 = vpop.f32.mrb[0].mxu0
    %v360 = vpop.f32.mrb[0].mxu0
    %v361 = vpop.f32.mrb[0].mxu0
    %362 = vdwg.mxu0
    %v363 = vlaneseq
    %v364 = vand.u32 %v363, 127
    %vm365 = vcmp.lt.s32.totalorder %v364, 16
    %v366 = vsel %vm365, %v358, -1e+30
    %367 = vmax.xlane.f32.xlu0 %v366
    %v368 = vpop.xlane.xlu0 %367
    %v369 = vsub.f32 %v366, %v368
    %v370 = vmul.f32 %v369, 1.442695
    %v371 = vpow.pop %v370
    %372 = vadd.xlane.f32.xlu0 %v371
    %v373 = vpop.xlane.xlu0 %372
    %v374 = vrcp.pop %v373
    %v375 = vmul.f32 %v373, %v374
    %v376 = vsub.f32 2.0, %v375
    %v377 = vmul.f32 %v374, %v376
    %v378 = vmul.f32 %v371, %v377
    %v379 = vlog2.pop %v373
    %v380 = vmul.f32 %v379, 0.6931472
    %v381 = vsub.f32 %v369, %v380
    %v382 = vadd.f32 %v381, %v173
    %v383 = vmul.f32 %v382, 1.4925373
    %v384 = vsel %vm365, %v383, -1e+30
    %385 = vmax.xlane.f32.xlu0 %v384
    %v386 = vpop.xlane.xlu0 %385
    %v387 = vsub.f32 %v384, %v386
    %v388 = vmul.f32 %v387, 1.442695
    %v389 = vpow.pop %v388
    %390 = vadd.xlane.f32.xlu0 %v389
    %v391 = vpop.xlane.xlu0 %390
    %v392 = vrcp.pop %v391
    %v393 = vmul.f32 %v391, %v392
    %v394 = vsub.f32 2.0, %v393
    %v395 = vmul.f32 %v392, %v394
    %v396 = vmul.f32 %v389, %v395
    %v397 = vpack.c.bf16 %v172, %v172
    %v398 = vld [vmem:[#allocation10] sm:$0xf]
    %v399 = vld [vmem:[#allocation10 + $0x4] sm:$0xf]
    %v400 = vld [vmem:[#allocation11] sm:$0x1]
    %v402 = vlaneseq
    %v403 = vshrl.u32 %v402, 7
    %v404 = vsub.s32 0, %v403
    %v405 = vrot.slane %v400, %v404
    %v409 = vunpack.c.l.b16 %v398
    %v410 = vunpack.c.l.b16 %v399
    %v411 = vpack.c.b16 %v410, %v409
    %vm413 = vcmask 130048
    %v415 = vsel %vm413, %v397, 0
    %417 = vmatprep.subr.bf16.mxu0 0
    %418 = vmatpush1.bf16.msra.mxu0 %v411
    %419 = vmatprep.subr.bf16.mxu0 0
    %420 = vmatpush1.bf16.msra.mxu0 0
    %421 = vmatprep.subr.bf16.mxu0 0
    %422 = vmatpush1.bf16.msra.mxu0 0
    %423 = vmatprep.subr.bf16.mxu0 0
    %424 = vmatpush1.bf16.msra.mxu0 0
    %425 = vmatprep.subr.bf16.mxu0 0
    %426 = vmatpush1.bf16.msra.mxu0 0
    %427 = vmatprep.subr.bf16.mxu0 0
    %428 = vmatpush1.bf16.msra.mxu0 0
    %429 = vmatprep.subr.bf16.mxu0 0
    %430 = vmatpush1.bf16.msra.mxu0 0
    %431 = vmatprep.subr.bf16.mxu0 0
    %432 = vmatpush1.bf16.msra.mxu0 0
    %433 = vmatprep.subr.bf16.mxu0 0
    %434 = vmatpush1.bf16.msra.mxu0 0
    %435 = vmatprep.subr.bf16.mxu0 0
    %436 = vmatpush1.bf16.msra.mxu0 0
    %437 = vmatprep.subr.bf16.mxu0 0
    %438 = vmatpush1.bf16.msra.mxu0 0
    %439 = vmatprep.subr.bf16.mxu0 0
    %440 = vmatpush1.bf16.msra.mxu0 0
    %441 = vmatprep.subr.bf16.mxu0 0
    %442 = vmatpush1.bf16.msra.mxu0 0
    %443 = vmatprep.subr.bf16.mxu0 0
    %444 = vmatpush1.bf16.msra.mxu0 0
    %445 = vmatprep.subr.bf16.mxu0 0
    %446 = vmatpush1.bf16.msra.mxu0 0
    %447 = vmatprep.subr.bf16.mxu0 0
    %448 = vmatpush1.bf16.msra.mxu0 0
    %449 = vmatprep.mubr.bf16.mxu0 0
    %450 = vmatmul.mubr.bf16.gmra.mrb[0].mxu0 %v415
    %v451 = vpop.f32.mrb[0].mxu0
    %v452 = vadd.f32 %v405, %v451
    %v453 = vpop.f32.mrb[0].mxu0
    %v454 = vpop.f32.mrb[0].mxu0
    %v455 = vpop.f32.mrb[0].mxu0
    %456 = vdwg.mxu0
    %v457 = vmax.f32 %v452, 0.0
    %v458 = vpack.c.bf16 %v457, %v457
    %v459 = vld [vmem:[#allocation13] sm:$0xf]
    %v460 = vld [vmem:[#allocation13 + $0x4] sm:$0xf]
    %v461 = vld [vmem:[#allocation13 + $0x8] sm:$0xf]
    %v462 = vld [vmem:[#allocation13 + $0xc] sm:$0xf]
    %v463 = vld [vmem:[#allocation13 + $0x10] sm:$0xf]
    %v464 = vld [vmem:[#allocation13 + $0x14] sm:$0xf]
    %v465 = vld [vmem:[#allocation13 + $0x18] sm:$0xf]
    %v466 = vld [vmem:[#allocation13 + $0x1c] sm:$0xf]
    %v467 = vld [vmem:[#allocation13 + $0x20] sm:$0xf]
    %v468 = vld [vmem:[#allocation13 + $0x24] sm:$0xf]
    %v469 = vld [vmem:[#allocation13 + $0x28] sm:$0xf]
    %v470 = vld [vmem:[#allocation13 + $0x2c] sm:$0xf]
    %v471 = vld [vmem:[#allocation13 + $0x30] sm:$0xf]
    %v472 = vld [vmem:[#allocation13 + $0x34] sm:$0xf]
    %v473 = vld [vmem:[#allocation13 + $0x38] sm:$0xf]
    %v474 = vld [vmem:[#allocation13 + $0x3c] sm:$0xf]
    %v475 = vld [vmem:[#allocation14] sm:$0x1]
    %v477 = vlaneseq
    %v478 = vshrl.u32 %v477, 7
    %v479 = vsub.s32 0, %v478
    %v480 = vrot.slane %v475, %v479
    %v498 = vunpack.c.l.b16 %v459
    %v499 = vunpack.c.l.b16 %v460
    %v500 = vunpack.c.l.b16 %v461
    %v501 = vunpack.c.l.b16 %v462
    %v502 = vunpack.c.l.b16 %v463
    %v503 = vunpack.c.l.b16 %v464
    %v504 = vunpack.c.l.b16 %v465
    %v505 = vunpack.c.l.b16 %v466
    %v506 = vunpack.c.l.b16 %v467
    %v507 = vunpack.c.l.b16 %v468
    %v508 = vunpack.c.l.b16 %v469
    %v509 = vunpack.c.l.b16 %v470
    %v510 = vunpack.c.l.b16 %v471
    %v511 = vunpack.c.l.b16 %v472
    %v512 = vunpack.c.l.b16 %v473
    %v513 = vunpack.c.l.b16 %v474
    %v514 = vpack.c.b16 %v499, %v498
    %v515 = vpack.c.b16 %v501, %v500
    %v516 = vpack.c.b16 %v503, %v502
    %v517 = vpack.c.b16 %v505, %v504
    %v518 = vpack.c.b16 %v507, %v506
    %v519 = vpack.c.b16 %v509, %v508
    %v520 = vpack.c.b16 %v511, %v510
    %v521 = vpack.c.b16 %v513, %v512
    %530 = vmatprep.subr.bf16.mxu0 0
    %531 = vmatpush1.bf16.msra.mxu0 %v514
    %532 = vmatprep.subr.bf16.mxu0 0
    %533 = vmatpush1.bf16.msra.mxu0 %v515
    %534 = vmatprep.subr.bf16.mxu0 0
    %535 = vmatpush1.bf16.msra.mxu0 %v516
    %536 = vmatprep.subr.bf16.mxu0 0
    %537 = vmatpush1.bf16.msra.mxu0 %v517
    %538 = vmatprep.subr.bf16.mxu0 0
    %539 = vmatpush1.bf16.msra.mxu0 %v518
    %540 = vmatprep.subr.bf16.mxu0 0
    %541 = vmatpush1.bf16.msra.mxu0 %v519
    %542 = vmatprep.subr.bf16.mxu0 0
    %543 = vmatpush1.bf16.msra.mxu0 %v520
    %544 = vmatprep.subr.bf16.mxu0 0
    %545 = vmatpush1.bf16.msra.mxu0 %v521
    %546 = vmatprep.subr.bf16.mxu0 0
    %547 = vmatpush1.bf16.msra.mxu0 0
    %548 = vmatprep.subr.bf16.mxu0 0
    %549 = vmatpush1.bf16.msra.mxu0 0
    %550 = vmatprep.subr.bf16.mxu0 0
    %551 = vmatpush1.bf16.msra.mxu0 0
    %552 = vmatprep.subr.bf16.mxu0 0
    %553 = vmatpush1.bf16.msra.mxu0 0
    %554 = vmatprep.subr.bf16.mxu0 0
    %555 = vmatpush1.bf16.msra.mxu0 0
    %556 = vmatprep.subr.bf16.mxu0 0
    %557 = vmatpush1.bf16.msra.mxu0 0
    %558 = vmatprep.subr.bf16.mxu0 0
    %559 = vmatpush1.bf16.msra.mxu0 0
    %560 = vmatprep.subr.bf16.mxu0 0
    %561 = vmatpush1.bf16.msra.mxu0 0
    %562 = vmatprep.mubr.bf16.mxu0 0
    %563 = vmatmul.mubr.bf16.gmra.mrb[0].mxu0 %v458
    %v564 = vpop.f32.mrb[0].mxu0
    %v565 = vadd.f32 %v480, %v564
    %v566 = vpop.f32.mrb[0].mxu0
    %v567 = vpop.f32.mrb[0].mxu0
    %v568 = vpop.f32.mrb[0].mxu0
    %569 = vdwg.mxu0
    %v570 = vsel %vm365, %v565, -1e+30
    %571 = vmax.xlane.f32.xlu0 %v570
    %v572 = vpop.xlane.xlu0 %571
    %v573 = vsub.f32 %v570, %v572
    %v574 = vmul.f32 %v573, 1.442695
    %v575 = vpow.pop %v574
    %576 = vadd.xlane.f32.xlu0 %v575
    %v577 = vpop.xlane.xlu0 %576
    %v578 = vrcp.pop %v577
    %v579 = vmul.f32 %v577, %v578
    %v580 = vsub.f32 2.0, %v579
    %v581 = vmul.f32 %v578, %v580
    %v582 = vmul.f32 %v575, %v581
    %v583 = vpack.c.bf16 %v396, %v396
    %v584 = vld [vmem:[%s11] sm:$0xf]
    %v585 = vld [vmem:[%s11 + $0x4] sm:$0xf]
    %v586 = vld [vmem:[%s11 + $0x8] sm:$0xf]
    %v587 = vld [vmem:[%s11 + $0xc] sm:$0xf]
    %v588 = vld [vmem:[%s11 + $0x10] sm:$0xf]
    %v589 = vld [vmem:[%s11 + $0x14] sm:$0xf]
    %v590 = vld [vmem:[%s11 + $0x18] sm:$0xf]
    %v591 = vld [vmem:[%s11 + $0x1c] sm:$0xf]
    %v592 = vld [vmem:[%s11 + $0x20] sm:$0xf]
    %v593 = vld [vmem:[%s11 + $0x24] sm:$0xf]
    %v594 = vld [vmem:[%s11 + $0x28] sm:$0xf]
    %v595 = vld [vmem:[%s11 + $0x2c] sm:$0xf]
    %v596 = vld [vmem:[%s11 + $0x30] sm:$0xf]
    %v597 = vld [vmem:[%s11 + $0x34] sm:$0xf]
    %v598 = vld [vmem:[%s11 + $0x38] sm:$0xf]
    %v599 = vld [vmem:[%s11 + $0x3c] sm:$0xf]
    %v600 = vld [vmem:[#allocation16] sm:$0x1]
    %v602 = vlaneseq
    %v603 = vshrl.u32 %v602, 7
    %v604 = vsub.s32 0, %v603
    %v605 = vrot.slane %v600, %v604
    %v623 = vunpack.c.l.b16 %v584
    %v624 = vunpack.c.l.b16 %v585
    %v625 = vunpack.c.l.b16 %v586
    %v626 = vunpack.c.l.b16 %v587
    %v627 = vunpack.c.l.b16 %v588
    %v628 = vunpack.c.l.b16 %v589
    %v629 = vunpack.c.l.b16 %v590
    %v630 = vunpack.c.l.b16 %v591
    %v631 = vunpack.c.l.b16 %v592
    %v632 = vunpack.c.l.b16 %v593
    %v633 = vunpack.c.l.b16 %v594
    %v634 = vunpack.c.l.b16 %v595
    %v635 = vunpack.c.l.b16 %v596
    %v636 = vunpack.c.l.b16 %v597
    %v637 = vunpack.c.l.b16 %v598
    %v638 = vunpack.c.l.b16 %v599
    %v639 = vpack.c.b16 %v624, %v623
    %v640 = vpack.c.b16 %v626, %v625
    %v641 = vpack.c.b16 %v628, %v627
    %v642 = vpack.c.b16 %v630, %v629
    %v643 = vpack.c.b16 %v632, %v631
    %v644 = vpack.c.b16 %v634, %v633
    %v645 = vpack.c.b16 %v636, %v635
    %v646 = vpack.c.b16 %v638, %v637
    %655 = vmatprep.subr.bf16.mxu0 0
    %656 = vmatpush1.bf16.msra.mxu0 %v639
    %657 = vmatprep.subr.bf16.mxu0 0
    %658 = vmatpush1.bf16.msra.mxu0 %v640
    %659 = vmatprep.subr.bf16.mxu0 0
    %660 = vmatpush1.bf16.msra.mxu0 %v641
    %661 = vmatprep.subr.bf16.mxu0 0
    %662 = vmatpush1.bf16.msra.mxu0 %v642
    %663 = vmatprep.subr.bf16.mxu0 0
    %664 = vmatpush1.bf16.msra.mxu0 %v643
    %665 = vmatprep.subr.bf16.mxu0 0
    %666 = vmatpush1.bf16.msra.mxu0 %v644
    %667 = vmatprep.subr.bf16.mxu0 0
    %668 = vmatpush1.bf16.msra.mxu0 %v645
    %669 = vmatprep.subr.bf16.mxu0 0
    %670 = vmatpush1.bf16.msra.mxu0 %v646
    %671 = vmatprep.subr.bf16.mxu0 0
    %672 = vmatpush1.bf16.msra.mxu0 0
    %673 = vmatprep.subr.bf16.mxu0 0
    %674 = vmatpush1.bf16.msra.mxu0 0
    %675 = vmatprep.subr.bf16.mxu0 0
    %676 = vmatpush1.bf16.msra.mxu0 0
    %677 = vmatprep.subr.bf16.mxu0 0
    %678 = vmatpush1.bf16.msra.mxu0 0
    %679 = vmatprep.subr.bf16.mxu0 0
    %680 = vmatpush1.bf16.msra.mxu0 0
    %681 = vmatprep.subr.bf16.mxu0 0
    %682 = vmatpush1.bf16.msra.mxu0 0
    %683 = vmatprep.subr.bf16.mxu0 0
    %684 = vmatpush1.bf16.msra.mxu0 0
    %685 = vmatprep.subr.bf16.mxu0 0
    %686 = vmatpush1.bf16.msra.mxu0 0
    %687 = vmatprep.mubr.bf16.mxu0 0
    %688 = vmatmul.mubr.bf16.gmra.mrb[0].mxu0 %v583
    %v689 = vpop.f32.mrb[0].mxu0
    %v690 = vadd.f32 %v605, %v689
    %v691 = vpop.f32.mrb[0].mxu0
    %v692 = vpop.f32.mrb[0].mxu0
    %v693 = vpop.f32.mrb[0].mxu0
    %694 = vdwg.mxu0
    %v695 = vmax.f32 %v690, 0.0
    %v696 = vpack.c.bf16 %v695, %v695
    %v697 = vld [vmem:[%s13] sm:$0xf]
    %v698 = vld [vmem:[%s13 + $0x4] sm:$0xf]
    %v699 = vld [vmem:[%s13 + $0x8] sm:$0xf]
    %v700 = vld [vmem:[%s13 + $0xc] sm:$0xf]
    %v701 = vld [vmem:[%s13 + $0x10] sm:$0xf]
    %v702 = vld [vmem:[%s13 + $0x14] sm:$0xf]
    %v703 = vld [vmem:[%s13 + $0x18] sm:$0xf]
    %v704 = vld [vmem:[%s13 + $0x1c] sm:$0xf]
    %v705 = vld [vmem:[%s13 + $0x20] sm:$0xf]
    %v706 = vld [vmem:[%s13 + $0x24] sm:$0xf]
    %v707 = vld [vmem:[%s13 + $0x28] sm:$0xf]
    %v708 = vld [vmem:[%s13 + $0x2c] sm:$0xf]
    %v709 = vld [vmem:[%s13 + $0x30] sm:$0xf]
    %v710 = vld [vmem:[%s13 + $0x34] sm:$0xf]
    %v711 = vld [vmem:[%s13 + $0x38] sm:$0xf]
    %v712 = vld [vmem:[%s13 + $0x3c] sm:$0xf]
    %v713 = vld [vmem:[%s14] sm:$0x1]
    %v715 = vlaneseq
    %v716 = vshrl.u32 %v715, 7
    %v717 = vsub.s32 0, %v716
    %v718 = vrot.slane %v713, %v717
    %v736 = vunpack.c.l.b16 %v697
    %v737 = vunpack.c.l.b16 %v698
    %v738 = vunpack.c.l.b16 %v699
    %v739 = vunpack.c.l.b16 %v700
    %v740 = vunpack.c.l.b16 %v701
    %v741 = vunpack.c.l.b16 %v702
    %v742 = vunpack.c.l.b16 %v703
    %v743 = vunpack.c.l.b16 %v704
    %v744 = vunpack.c.l.b16 %v705
    %v745 = vunpack.c.l.b16 %v706
    %v746 = vunpack.c.l.b16 %v707
    %v747 = vunpack.c.l.b16 %v708
    %v748 = vunpack.c.l.b16 %v709
    %v749 = vunpack.c.l.b16 %v710
    %v750 = vunpack.c.l.b16 %v711
    %v751 = vunpack.c.l.b16 %v712
    %v752 = vpack.c.b16 %v737, %v736
    %v753 = vpack.c.b16 %v739, %v738
    %v754 = vpack.c.b16 %v741, %v740
    %v755 = vpack.c.b16 %v743, %v742
    %v756 = vpack.c.b16 %v745, %v744
    %v757 = vpack.c.b16 %v747, %v746
    %v758 = vpack.c.b16 %v749, %v748
    %v759 = vpack.c.b16 %v751, %v750
    %768 = vmatprep.subr.bf16.mxu0 0
    %769 = vmatpush1.bf16.msra.mxu0 %v752
    %770 = vmatprep.subr.bf16.mxu0 0
    %771 = vmatpush1.bf16.msra.mxu0 %v753
    %772 = vmatprep.subr.bf16.mxu0 0
    %773 = vmatpush1.bf16.msra.mxu0 %v754
    %774 = vmatprep.subr.bf16.mxu0 0
    %775 = vmatpush1.bf16.msra.mxu0 %v755
    %776 = vmatprep.subr.bf16.mxu0 0
    %777 = vmatpush1.bf16.msra.mxu0 %v756
    %778 = vmatprep.subr.bf16.mxu0 0
    %779 = vmatpush1.bf16.msra.mxu0 %v757
    %780 = vmatprep.subr.bf16.mxu0 0
    %781 = vmatpush1.bf16.msra.mxu0 %v758
    %782 = vmatprep.subr.bf16.mxu0 0
    %783 = vmatpush1.bf16.msra.mxu0 %v759
    %784 = vmatprep.subr.bf16.mxu0 0
    %785 = vmatpush1.bf16.msra.mxu0 0
    %786 = vmatprep.subr.bf16.mxu0 0
    %787 = vmatpush1.bf16.msra.mxu0 0
    %788 = vmatprep.subr.bf16.mxu0 0
    %789 = vmatpush1.bf16.msra.mxu0 0
    %790 = vmatprep.subr.bf16.mxu0 0
    %791 = vmatpush1.bf16.msra.mxu0 0
    %792 = vmatprep.subr.bf16.mxu0 0
    %793 = vmatpush1.bf16.msra.mxu0 0
    %794 = vmatprep.subr.bf16.mxu0 0
    %795 = vmatpush1.bf16.msra.mxu0 0
    %796 = vmatprep.subr.bf16.mxu0 0
    %797 = vmatpush1.bf16.msra.mxu0 0
    %798 = vmatprep.subr.bf16.mxu0 0
    %799 = vmatpush1.bf16.msra.mxu0 0
    %800 = vmatprep.mubr.bf16.mxu0 0
    %801 = vmatmul.mubr.bf16.gmra.mrb[0].mxu0 %v696
    %v802 = vpop.f32.mrb[0].mxu0
    %v803 = vadd.f32 %v718, %v802
    %v804 = vpop.f32.mrb[0].mxu0
    %v805 = vpop.f32.mrb[0].mxu0
    %v806 = vpop.f32.mrb[0].mxu0
    %807 = vdwg.mxu0
    %v808 = vmul.f32 %v803, 0.5
    %v809 = vtanh.pop %v808
    %v810 = vadd.f32 %v809, 1.0
    %v811 = vmul.f32 %v810, 0.5
    %812 = vst [vmem:[#allocation17] sm:$0xff] %v811
    %813 = vst [vmem:[#allocation18] sm:$0xff] %v378
    %814 = vst [vmem:[#allocation20] sm:$0xff] %v582
    %815 = vst [vmem:[#allocation21] sm:$0xff] %v396
    %816 = vst [vmem:[#allocation23] sm:$0xff] %v457
    // Predicated region
    $region98: #{forward.1} parent=1 // pred_check
      _
    $region99: #{forward.1} parent=1 // pred_check_branch
      %818 = sbr.rel (0) target = $region101
    $region100: #{forward.1} parent=1 // pred_region
      %s820 = ssub.s32 128, 128
      %821 = vsyncadd [#allocation4], %s820
      %s823 = sshll.u32 [#allocation17], 4
      %s824 = int_to_ptr.vmem [resolvable:$true] %s823
      %826 = dma.vmem_to_hbm [thread:$0]  %s824, 128, %s15, [#allocation4]
    $region101: #{forward.1} parent=1 // pred_fallthru
      _
    // Predicated region
    $region102: #{forward.1} parent=1 // pred_check
      _
    $region103: #{forward.1} parent=1 // pred_check_branch
      %828 = sbr.rel (0) target = $region105
    $region104: #{forward.1} parent=1 // pred_region
      %s830 = ssub.s32 128, 128
      %831 = vsyncadd [#allocation19], %s830
      %s833 = sshll.u32 [#allocation18], 4
      %s834 = int_to_ptr.vmem [resolvable:$true] %s833
      %836 = dma.vmem_to_hbm [thread:$0]  %s834, 128, %s16, [#allocation19]
    $region105: #{forward.1} parent=1 // pred_fallthru
      _
    // Predicated region
    $region106: #{forward.1} parent=1 // pred_check
      _
    $region107: #{forward.1} parent=1 // pred_check_branch
      %838 = sbr.rel (0) target = $region109
    $region108: #{forward.1} parent=1 // pred_region
      %s840 = ssub.s32 128, 128
      %841 = vsyncadd [#allocation19], %s840
      %s843 = sshll.u32 [#allocation20], 4
      %s844 = int_to_ptr.vmem [resolvable:$true] %s843
      %846 = dma.vmem_to_hbm [thread:$0]  %s844, 128, %s17, [#allocation19]
    $region109: #{forward.1} parent=1 // pred_fallthru
      _
    // Predicated region
    $region110: #{forward.1} parent=1 // pred_check
      _
    $region111: #{forward.1} parent=1 // pred_check_branch
      %848 = sbr.rel (0) target = $region113
    $region112: #{forward.1} parent=1 // pred_region
      %s850 = ssub.s32 128, 128
      %851 = vsyncadd [#allocation22], %s850
      %s853 = sshll.u32 [#allocation21], 4
      %s854 = int_to_ptr.vmem [resolvable:$true] %s853
      %856 = dma.vmem_to_hbm [thread:$0]  %s854, 128, %s18, [#allocation22]
    $region113: #{forward.1} parent=1 // pred_fallthru
      _
    // Predicated region
    $region114: #{forward.1} parent=1 // pred_check
      _
    $region115: #{forward.1} parent=1 // pred_check_branch
      %858 = sbr.rel (0) target = $region117
    $region116: #{forward.1} parent=1 // pred_region
      %s860 = ssub.s32 128, 128
      %861 = vsyncadd [#allocation22], %s860
      %s863 = sshll.u32 [#allocation23], 4
      %s864 = int_to_ptr.vmem [resolvable:$true] %s863
      %866 = dma.vmem_to_hbm [thread:$0]  %s864, 128, %s19, [#allocation22]
    $region117: #{forward.1} parent=1 // pred_fallthru
      _
    // Predicated region
    $region118: #{forward.1} parent=1 // pred_check
      _
    $region119: #{forward.1} parent=1 // pred_check_branch
      %868 = sbr.rel (0) target = $region121
    $region120: #{forward.1} parent=1 // pred_region
      %869 = dma.done [#allocation4], 128
    $region121: #{forward.1} parent=1 // pred_fallthru
      _
    // Predicated region
    $region122: #{forward.1} parent=1 // pred_check
      _
    $region123: #{forward.1} parent=1 // pred_check_branch
      %871 = sbr.rel (0) target = $region125
    $region124: #{forward.1} parent=1 // pred_region
      %872 = dma.done [#allocation19], 128
    $region125: #{forward.1} parent=1 // pred_fallthru
      _
    // Predicated region
    $region126: #{forward.1} parent=1 // pred_check
      _
    $region127: #{forward.1} parent=1 // pred_check_branch
      %874 = sbr.rel (0) target = $region129
    $region128: #{forward.1} parent=1 // pred_region
      %875 = dma.done [#allocation19], 128
    $region129: #{forward.1} parent=1 // pred_fallthru
      _
    // Predicated region
    $region130: #{forward.1} parent=1 // pred_check
      _
    $region131: #{forward.1} parent=1 // pred_check_branch
      %877 = sbr.rel (0) target = $region133
    $region132: #{forward.1} parent=1 // pred_region
      %878 = dma.done [#allocation22], 128
    $region133: #{forward.1} parent=1 // pred_fallthru
      _
    // Predicated region
    $region134: #{forward.1} parent=1 // pred_check
      _
    $region135: #{forward.1} parent=1 // pred_check_branch
      %880 = sbr.rel (0) target = $region137
    $region136: #{forward.1} parent=1 // pred_region
      %881 = dma.done [#allocation22], 128
    $region137: #{forward.1} parent=1 // pred_fallthru
      _
    %882 = vsyncpa [#allocation3], 1
    %883 = vsyncpa [#allocation6], 1
    %884 = vsyncpa [#allocation9], 1
    %885 = vsyncpa [#allocation12], 1
    %886 = vsyncpa [#allocation15], 1
    %887 = vsyncpa [#allocation4], 1
    %888 = vsyncpa [#allocation19], 1
    %889 = vsyncpa [#allocation22], 1

</llo_original>
